<compile_context>
chip_gen: v6e
topology: v6e:2x2x1
jax: 0.10.0
libtpu: 0.0.40
codegen_flags: <defaults>
</compile_context>

<pallas_src>
import functools

import numpy as np
import jax
import jax.numpy as jnp
from jax import lax
from jax.experimental import pallas as pl
from jax.experimental.pallas import tpu as pltpu


def _round_up(x, m):
    return ((x + m - 1) // m) * m


def _nce_kernel(scale_ref, q_ref, k_ref, neg_ref, loss_ref,
                qs_ref, m_ref, s_ref, pos_ref, *, n_neg, tile_n, has_pad):
    """One (q-tile i, neg-tile j) grid step.

    scale_ref : (1,) f32 SMEM         logit_scale parameter
    q_ref     : (tb, D)               current query tile (original dtype)
    k_ref     : (B, D)  mxu dtype     pre-normalized keys (VMEM-resident)
    neg_ref   : (tn, D) mxu dtype     current RAW negatives tile (streamed)
    loss_ref  : (tb, 1) f32           per-row loss (written at last j)
    qs_ref    : (tb, D) mxu dtype     cached q * logit_scale/||q||
    m/s/pos   : (tb, 1) f32 VMEM      online-LSE state + positive logit
    """
    j = pl.program_id(1)
    nj = pl.num_programs(1)
    eps2 = jnp.float32(1e-24)  # (F.normalize eps = 1e-12)^2, clamp on sum-sq

    # ---- once per q tile (j == 0): cache scaled/normalized q, do the
    # positive block against the pre-normalized resident k, init LSE state.
    @pl.when(j == 0)
    def _init():
        qf = q_ref[...].astype(jnp.float32)
        inv_q = lax.rsqrt(
            jnp.maximum(jnp.sum(qf * qf, axis=1, keepdims=True), eps2))
        qs_ref[...] = (qf * (inv_q * scale_ref[0])).astype(qs_ref.dtype)

        # contract the last (lane) dims directly -- no materialized transpose
        l_pos = lax.dot_general(
            qs_ref[...], k_ref[...],
            dimension_numbers=(((1,), (1,)), ((), ())),
            preferred_element_type=jnp.float32)                 # (tb, B)
        m0 = jnp.max(l_pos, axis=1, keepdims=True)
        m_ref[...] = m0
        s_ref[...] = jnp.sum(jnp.exp(l_pos - m0), axis=1, keepdims=True)
        pos_ref[...] = l_pos[:, 0:1]        # labels == 0 -> target logit

    # ---- every j: stream one RAW negatives tile, normalize post-matmul -----
    neg = neg_ref[...]                                          # (tn, D)
    negf = neg.astype(jnp.float32)
    # 1/||neg_row|| laid out lane-dense as (1, tn) via a ones-contraction, so
    # it scales the (tb, tn) logits directly without any relayout.
    ss = lax.dot_general(
        jnp.ones((1, negf.shape[1]), jnp.float32), negf * negf,
        dimension_numbers=(((1,), (1,)), ((), ())),
        preferred_element_type=jnp.float32)                     # (1, tn)
    inv_n = lax.rsqrt(jnp.maximum(ss, eps2))

    l_neg = lax.dot_general(
        qs_ref[...], neg,
        dimension_numbers=(((1,), (1,)), ((), ())),
        preferred_element_type=jnp.float32) * inv_n             # (tb, tn)

    if has_pad:
        # Static branch: only emitted when N % tile_n != 0. Padded neg rows
        # are zero vectors -> raw dot is exactly 0, so an additive (1, tn)
        # 0 / -inf bias masks them (cheap; no full-tile iota/compare/select).
        col = j * tile_n + lax.broadcasted_iota(jnp.int32, (1, tile_n), 1)
        l_neg = l_neg + jnp.where(col < n_neg,
                                  jnp.float32(0.0), jnp.float32(-jnp.inf))

    # ---- online (flash-style) log-sum-exp update ----------------------------
    m_prev = m_ref[...]
    m_new = jnp.maximum(m_prev, jnp.max(l_neg, axis=1, keepdims=True))
    alpha = jnp.exp(m_prev - m_new)
    s_ref[...] = alpha * s_ref[...] + jnp.sum(jnp.exp(l_neg - m_new),
                                              axis=1, keepdims=True)
    m_ref[...] = m_new

    # ---- last j: per-row loss = logsumexp - positive logit ------------------
    @pl.when(j == nj - 1)
    def _finalize():
        loss_ref[...] = m_ref[...] + jnp.log(s_ref[...]) - pos_ref[...]


def nce_loss(q, k, neg, logit_scale, *, tile_b=256, tile_n=512,
             mxu_dtype=jnp.bfloat16):
    """q: (B, D), k: (B, D), neg: (N, D), logit_scale: (1,) f32 -> scalar loss.

    Defaults target real workloads (256/512 tiles, bf16 MXU operands). Tiles
    are clamped to the padded problem size, so small demo shapes still work.
    """
    B, D = q.shape
    N = neg.shape[0]

    # ---- tile selection ------------------------------------------------------
    b8 = _round_up(B, 8)
    n8 = _round_up(N, 8)
    tile_b = min(tile_b, b8)
    tile_n = min(tile_n, n8)
    # v7x megacore: keep >= 2 q tiles when the batch allows, so both
    # TensorCores get work on the "parallel" i axis.
    if b8 // tile_b < 2 and b8 >= 16:
        tile_b = _round_up((b8 + 1) // 2, 8)
    b_pad = _round_up(B, tile_b)
    n_pad = _round_up(N, tile_n)
    n_i = b_pad // tile_b
    n_j = n_pad // tile_n

    # ---- operand prep (tiny O(B*D) / O(N*D) wrapper work) -------------------
    scale = jnp.asarray(logit_scale, jnp.float32).reshape((1,))

    if b_pad != B:                      # padded q rows are sliced off below
        q = jnp.pad(q, ((0, b_pad - B), (0, 0)))

    # Pre-normalize k ONCE (it is re-used by every q tile) and keep it
    # VMEM-resident in the MXU dtype.
    kf = k.astype(jnp.float32)
    k_n = (kf * lax.rsqrt(
        jnp.maximum(jnp.sum(kf * kf, axis=1, keepdims=True),
                    jnp.float32(1e-24)))).astype(mxu_dtype)

    # The big streamed operand goes in raw (normalized in-kernel, post-matmul)
    # but already in the MXU dtype so the HBM stream is halved for bf16.
    neg = neg.astype(mxu_dtype)
    if n_pad != N:                      # padded rows masked in-kernel
        neg = jnp.pad(neg, ((0, n_pad - N), (0, 0)))

    kernel = functools.partial(_nce_kernel, n_neg=N, tile_n=tile_n,
                               has_pad=(n_pad != N))

    per_row = pl.pallas_call(
        kernel,
        out_shape=jax.ShapeDtypeStruct((b_pad, 1), jnp.float32),
        grid=(n_i, n_j),
        in_specs=[
            pl.BlockSpec(memory_space=pltpu.SMEM),                 # logit_scale
            pl.BlockSpec((tile_b, D), lambda i, j: (i, 0)),        # q tile
            pl.BlockSpec((k_n.shape[0], D), lambda i, j: (0, 0)),  # k (resident)
            pl.BlockSpec((tile_n, D), lambda i, j: (j, 0)),        # neg tile
        ],
        out_specs=pl.BlockSpec((tile_b, 1), lambda i, j: (i, 0)),
        scratch_shapes=[
            pltpu.VMEM((tile_b, D), mxu_dtype),     # qs = q * logit_scale/||q||
            pltpu.VMEM((tile_b, 1), jnp.float32),   # running max
            pltpu.VMEM((tile_b, 1), jnp.float32),   # running sum-exp
            pltpu.VMEM((tile_b, 1), jnp.float32),   # positive logit
        ],
        compiler_params=pltpu.CompilerParams(
            dimension_semantics=("parallel", "arbitrary"),
            vmem_limit_bytes=64 * 1024 * 1024),     # valid budget on v7x too
    )(scale, q, k_n, neg)

    # Final mean over the true batch rows: trivial (B,)-length reduction kept
    # in plain JAX so the i grid axis stays megacore-parallel.
    return jnp.mean(per_row[:B, 0])


def _reference(q, k, neg, logit_scale):
    # Faithful normalize -> matmul -> scale -> cross-entropy(label 0) reference.
    def norm(x):
        n = jnp.sqrt(jnp.sum(x * x, axis=1, keepdims=True))
        return x / jnp.maximum(n, 1e-12)
    qn, kn, ng = norm(q), norm(k), norm(neg)
    logits = jnp.concatenate([qn @ kn.T, qn @ ng.T], axis=1) * logit_scale[0]
    lse = jax.scipy.special.logsumexp(logits, axis=1)
    return jnp.mean(lse - logits[:, 0])


if __name__ == "__main__":
    # Small shapes; N=40 exercises negative-column masking and multiple j
    # tiles, B=12 exercises q-row padding and a 2-tile parallel i axis.
    B, D, N = 12, 32, 40

    key = jax.random.PRNGKey(0)
    kq, kk, kn = jax.random.split(key, 3)
    q = jax.random.normal(kq, (B, D), dtype=jnp.float32)
    k = jax.random.normal(kk, (B, D), dtype=jnp.float32)
    neg = jax.random.normal(kn, (N, D), dtype=jnp.float32)

    # Deterministic parameter init, as in __init__: ones([]) * log(1/0.07)
    logit_scale = jnp.full((1,), np.log(1.0 / 0.07), dtype=jnp.float32)

    ref = _reference(q, k, neg, logit_scale)

    # 1) f32 MXU path with explicit small tiles: exercises padding + masking
    #    (has_pad=True, nj=3) and checks tightly against the reference.
    loss_f32 = nce_loss(q, k, neg, logit_scale,
                        tile_b=8, tile_n=16, mxu_dtype=jnp.float32)
    loss_f32 = jax.block_until_ready(loss_f32)
    np.testing.assert_allclose(np.asarray(loss_f32), np.asarray(ref),
                               rtol=1e-5, atol=1e-4)

    # 2) Default (performance) path: bf16 MXU operands, large-tile defaults
    #    clamped to the problem size (has_pad=False, nj=1).
    loss_bf16 = nce_loss(q, k, neg, logit_scale)
    loss_bf16 = jax.block_until_ready(loss_bf16)
    np.testing.assert_allclose(np.asarray(loss_bf16), np.asarray(ref),
                               rtol=2e-2, atol=5e-2)

    print("KERNEL_OK")
</pallas_src>

<mosaic_0001>
module attributes {stable_mosaic.version = 11 : i64} {
  func.func @_nce_kernel(%arg0: i32, %arg1: i32, %arg2: memref<1xf32, #tpu.memory_space<smem>>, %arg3: memref<8x32xf32, #tpu.memory_space<vmem>>, %arg4: memref<12x32xf32, #tpu.memory_space<vmem>>, %arg5: memref<16x32xf32, #tpu.memory_space<vmem>>, %arg6: memref<8x1xf32, #tpu.memory_space<vmem>>, %arg7: memref<8x32xf32, #tpu.memory_space<vmem>>, %arg8: memref<8x1xf32, #tpu.memory_space<vmem>>, %arg9: memref<8x1xf32, #tpu.memory_space<vmem>>, %arg10: memref<8x1xf32, #tpu.memory_space<vmem>>) attributes {dimension_semantics = [#tpu.dimension_semantics<parallel>, #tpu.dimension_semantics<arbitrary>], iteration_bounds = array<i64: 2, 3>, scalar_prefetch = 0 : i64, scratch_operands = 4 : i64, tpu.core_type = #tpu.core_type<tc>, window_params = [{transform_indices = @transform_0, window_bounds = array<i64: 1>}, {transform_indices = @transform_1, window_bounds = array<i64: 8, 32>}, {pipeline_mode = #tpu.pipeline_mode<synchronous>, transform_indices = @transform_2, window_bounds = array<i64: 12, 32>}, {transform_indices = @transform_3, window_bounds = array<i64: 16, 32>}, {transform_indices = @transform_4, window_bounds = array<i64: 8, 1>}]} {
    %c0_i32 = arith.constant 0 : i32
    %0 = arith.cmpi eq, %arg1, %c0_i32 : i32
    %1 = arith.extui %0 : i1 to i32
    %cst = arith.constant 1.000000e-24 : f32
    %c0_i32_0 = arith.constant 0 : i32
    %2 = arith.cmpi ne, %1, %c0_i32_0 : i32
    scf.if %2 {
      %c0_21 = arith.constant 0 : index
      %c0_22 = arith.constant 0 : index
      %44 = vector.load %arg3[%c0_21, %c0_22] : memref<8x32xf32, #tpu.memory_space<vmem>>, vector<8x32xf32>
      %45 = arith.mulf %44, %44 : vector<8x32xf32>
      %cst_23 = arith.constant dense<0.000000e+00> : vector<8xf32>
      %46 = vector.multi_reduction <add>, %45, %cst_23 [1] : vector<8x32xf32> to vector<8xf32>
      %47 = vector.shape_cast %46 : vector<8xf32> to vector<8x1xf32>
      %48 = vector.broadcast %cst : f32 to vector<8x1xf32>
      %49 = arith.maximumf %47, %48 : vector<8x1xf32>
      %50 = math.rsqrt %49 : vector<8x1xf32>
      %c0_24 = arith.constant 0 : index
      %51 = memref.load %arg2[%c0_24] : memref<1xf32, #tpu.memory_space<smem>>
      %52 = vector.broadcast %51 : f32 to vector<8x1xf32>
      %53 = arith.mulf %50, %52 : vector<8x1xf32>
      %54 = vector.broadcast %53 : vector<8x1xf32> to vector<8x32xf32>
      %55 = arith.mulf %44, %54 : vector<8x32xf32>
      %c0_25 = arith.constant 0 : index
      %c0_26 = arith.constant 0 : index
      %56 = vector.load %arg7[%c0_25, %c0_26] : memref<8x32xf32, #tpu.memory_space<vmem>>, vector<8x32xf32>
      tpu.vector_store %arg7[%c0_25, %c0_26], %55 {strides = array<i32>} : memref<8x32xf32, #tpu.memory_space<vmem>>, vector<8x32xf32>,
      %c0_27 = arith.constant 0 : index
      %c0_28 = arith.constant 0 : index
      %57 = vector.load %arg7[%c0_27, %c0_28] : memref<8x32xf32, #tpu.memory_space<vmem>>, vector<8x32xf32>
      %c0_29 = arith.constant 0 : index
      %c0_30 = arith.constant 0 : index
      %58 = vector.load %arg4[%c0_29, %c0_30] : memref<12x32xf32, #tpu.memory_space<vmem>>, vector<12x32xf32>
      %cst_31 = arith.constant dense<0.000000e+00> : vector<8x12xf32>
      %59 = tpu.matmul %57, %58, %cst_31 {dimension_numbers = #tpu.dot_dimension_numbers<[1], [1], [0], [0], [0, 0, 1, 0], [], []>} : vector<8x32xf32>, vector<12x32xf32>, vector<8x12xf32> -> vector<8x12xf32>
      %cst_32 = arith.constant dense<0xFF800000> : vector<8xf32>
      %60 = vector.multi_reduction <maximumf>, %59, %cst_32 [1] : vector<8x12xf32> to vector<8xf32>
      %61 = vector.shape_cast %60 : vector<8xf32> to vector<8x1xf32>
      %c0_33 = arith.constant 0 : index
      %c0_34 = arith.constant 0 : index
      %62 = vector.load %arg8[%c0_33, %c0_34] : memref<8x1xf32, #tpu.memory_space<vmem>>, vector<8x1xf32>
      tpu.vector_store %arg8[%c0_33, %c0_34], %61 {strides = array<i32>} : memref<8x1xf32, #tpu.memory_space<vmem>>, vector<8x1xf32>,
      %63 = vector.broadcast %61 : vector<8x1xf32> to vector<8x12xf32>
      %64 = arith.subf %59, %63 : vector<8x12xf32>
      %65 = math.exp %64 : vector<8x12xf32>
      %cst_35 = arith.constant dense<0.000000e+00> : vector<8xf32>
      %66 = vector.multi_reduction <add>, %65, %cst_35 [1] : vector<8x12xf32> to vector<8xf32>
      %67 = vector.shape_cast %66 : vector<8xf32> to vector<8x1xf32>
      %c0_36 = arith.constant 0 : index
      %c0_37 = arith.constant 0 : index
      %68 = vector.load %arg9[%c0_36, %c0_37] : memref<8x1xf32, #tpu.memory_space<vmem>>, vector<8x1xf32>
      tpu.vector_store %arg9[%c0_36, %c0_37], %67 {strides = array<i32>} : memref<8x1xf32, #tpu.memory_space<vmem>>, vector<8x1xf32>,
      %69 = vector.extract_strided_slice %59 {offsets = [0, 0], sizes = [8, 1], strides = [1, 1]} : vector<8x12xf32> to vector<8x1xf32>
      %c0_38 = arith.constant 0 : index
      %c0_39 = arith.constant 0 : index
      %70 = vector.load %arg10[%c0_38, %c0_39] : memref<8x1xf32, #tpu.memory_space<vmem>>, vector<8x1xf32>
      tpu.vector_store %arg10[%c0_38, %c0_39], %69 {strides = array<i32>} : memref<8x1xf32, #tpu.memory_space<vmem>>, vector<8x1xf32>,
    } else {
    }
    %c0 = arith.constant 0 : index
    %c0_1 = arith.constant 0 : index
    %3 = vector.load %arg5[%c0, %c0_1] : memref<16x32xf32, #tpu.memory_space<vmem>>, vector<16x32xf32>
    %cst_2 = arith.constant 1.000000e+00 : f32
    %4 = vector.broadcast %cst_2 : f32 to vector<1x32xf32>
    %5 = arith.mulf %3, %3 : vector<16x32xf32>
    %cst_3 = arith.constant dense<0.000000e+00> : vector<1x16xf32>
    %6 = tpu.matmul %4, %5, %cst_3 {dimension_numbers = #tpu.dot_dimension_numbers<[1], [1], [0], [0], [0, 0, 1, 0], [], []>} : vector<1x32xf32>, vector<16x32xf32>, vector<1x16xf32> -> vector<1x16xf32>
    %cst_4 = arith.constant 1.000000e-24 : f32
    %7 = vector.broadcast %cst_4 : f32 to vector<1x16xf32>
    %8 = arith.maximumf %6, %7 : vector<1x16xf32>
    %9 = math.rsqrt %8 : vector<1x16xf32>
    %c0_5 = arith.constant 0 : index
    %c0_6 = arith.constant 0 : index
    %10 = vector.load %arg7[%c0_5, %c0_6] : memref<8x32xf32, #tpu.memory_space<vmem>>, vector<8x32xf32>
    %cst_7 = arith.constant dense<0.000000e+00> : vector<8x16xf32>
    %11 = tpu.matmul %10, %3, %cst_7 {dimension_numbers = #tpu.dot_dimension_numbers<[1], [1], [0], [0], [0, 0, 1, 0], [], []>} : vector<8x32xf32>, vector<16x32xf32>, vector<8x16xf32> -> vector<8x16xf32>
    %12 = vector.broadcast %9 : vector<1x16xf32> to vector<8x16xf32>
    %13 = arith.mulf %11, %12 : vector<8x16xf32>
    %c16_i32 = arith.constant 16 : i32
    %14 = arith.muli %arg1, %c16_i32 : i32
    %15 = tpu.iota {dimensions = array<i32: 1>} : vector<1x16xi32>
    %16 = vector.broadcast %14 : i32 to vector<1x16xi32>
    %17 = arith.addi %16, %15 : vector<1x16xi32>
    %c40_i32 = arith.constant 40 : i32
    %18 = vector.broadcast %c40_i32 : i32 to vector<1x16xi32>
    %19 = arith.cmpi slt, %17, %18 : vector<1x16xi32>
    %cst_8 = arith.constant 0.000000e+00 : f32
    %cst_9 = arith.constant 0xFF800000 : f32
    %20 = vector.broadcast %cst_8 : f32 to vector<1x16xf32>
    %21 = vector.broadcast %cst_9 : f32 to vector<1x16xf32>
    %22 = arith.select %19, %20, %21 : vector<1x16xi1>, vector<1x16xf32>
    %23 = vector.broadcast %22 : vector<1x16xf32> to vector<8x16xf32>
    %24 = arith.addf %13, %23 : vector<8x16xf32>
    %c0_10 = arith.constant 0 : index
    %c0_11 = arith.constant 0 : index
    %25 = vector.load %arg8[%c0_10, %c0_11] : memref<8x1xf32, #tpu.memory_space<vmem>>, vector<8x1xf32>
    %cst_12 = arith.constant dense<0xFF800000> : vector<8xf32>
    %26 = vector.multi_reduction <maximumf>, %24, %cst_12 [1] : vector<8x16xf32> to vector<8xf32>
    %27 = vector.shape_cast %26 : vector<8xf32> to vector<8x1xf32>
    %28 = arith.maximumf %25, %27 : vector<8x1xf32>
    %29 = arith.subf %25, %28 : vector<8x1xf32>
    %30 = math.exp %29 : vector<8x1xf32>
    %c0_13 = arith.constant 0 : index
    %c0_14 = arith.constant 0 : index
    %31 = vector.load %arg9[%c0_13, %c0_14] : memref<8x1xf32, #tpu.memory_space<vmem>>, vector<8x1xf32>
    %32 = arith.mulf %30, %31 : vector<8x1xf32>
    %33 = vector.broadcast %28 : vector<8x1xf32> to vector<8x16xf32>
    %34 = arith.subf %24, %33 : vector<8x16xf32>
    %35 = math.exp %34 : vector<8x16xf32>
    %cst_15 = arith.constant dense<0.000000e+00> : vector<8xf32>
    %36 = vector.multi_reduction <add>, %35, %cst_15 [1] : vector<8x16xf32> to vector<8xf32>
    %37 = vector.shape_cast %36 : vector<8xf32> to vector<8x1xf32>
    %38 = arith.addf %32, %37 : vector<8x1xf32>
    %c0_16 = arith.constant 0 : index
    %c0_17 = arith.constant 0 : index
    %39 = vector.load %arg9[%c0_16, %c0_17] : memref<8x1xf32, #tpu.memory_space<vmem>>, vector<8x1xf32>
    tpu.vector_store %arg9[%c0_16, %c0_17], %38 {strides = array<i32>} : memref<8x1xf32, #tpu.memory_space<vmem>>, vector<8x1xf32>,
    %c0_18 = arith.constant 0 : index
    %c0_19 = arith.constant 0 : index
    %40 = vector.load %arg8[%c0_18, %c0_19] : memref<8x1xf32, #tpu.memory_space<vmem>>, vector<8x1xf32>
    tpu.vector_store %arg8[%c0_18, %c0_19], %28 {strides = array<i32>} : memref<8x1xf32, #tpu.memory_space<vmem>>, vector<8x1xf32>,
    %c2_i32 = arith.constant 2 : i32
    %41 = arith.cmpi eq, %arg1, %c2_i32 : i32
    %42 = arith.extui %41 : i1 to i32
    %c0_i32_20 = arith.constant 0 : i32
    %43 = arith.cmpi ne, %42, %c0_i32_20 : i32
    scf.if %43 {
      %c0_21 = arith.constant 0 : index
      %c0_22 = arith.constant 0 : index
      %44 = vector.load %arg8[%c0_21, %c0_22] : memref<8x1xf32, #tpu.memory_space<vmem>>, vector<8x1xf32>
      %c0_23 = arith.constant 0 : index
      %c0_24 = arith.constant 0 : index
      %45 = vector.load %arg9[%c0_23, %c0_24] : memref<8x1xf32, #tpu.memory_space<vmem>>, vector<8x1xf32>
      %46 = math.log %45 : vector<8x1xf32>
      %47 = arith.addf %44, %46 : vector<8x1xf32>
      %c0_25 = arith.constant 0 : index
      %c0_26 = arith.constant 0 : index
      %48 = vector.load %arg10[%c0_25, %c0_26] : memref<8x1xf32, #tpu.memory_space<vmem>>, vector<8x1xf32>
      %49 = arith.subf %47, %48 : vector<8x1xf32>
      %c0_27 = arith.constant 0 : index
      %c0_28 = arith.constant 0 : index
      %50 = vector.load %arg6[%c0_27, %c0_28] : memref<8x1xf32, #tpu.memory_space<vmem>>, vector<8x1xf32>
      tpu.vector_store %arg6[%c0_27, %c0_28], %49 {strides = array<i32>} : memref<8x1xf32, #tpu.memory_space<vmem>>, vector<8x1xf32>,
    } else {
    }
    return
  }
  func.func @transform_0(%arg0: i32, %arg1: i32) -> i32 {
    %c0_i32 = arith.constant 0 : i32
    %c0_i32_0 = arith.constant 0 : i32
    return %c0_i32 : i32
  }
  func.func @transform_1(%arg0: i32, %arg1: i32) -> (i32, i32) {
    %c0_i32 = arith.constant 0 : i32
    %c0_i32_0 = arith.constant 0 : i32
    return %arg0, %c0_i32 : i32, i32
  }
  func.func @transform_2(%arg0: i32, %arg1: i32) -> (i32, i32) {
    %c0_i32 = arith.constant 0 : i32
    %c0_i32_0 = arith.constant 0 : i32
    %c0_i32_1 = arith.constant 0 : i32
    return %c0_i32, %c0_i32_0 : i32, i32
  }
  func.func @transform_3(%arg0: i32, %arg1: i32) -> (i32, i32) {
    %c0_i32 = arith.constant 0 : i32
    %c0_i32_0 = arith.constant 0 : i32
    return %arg1, %c0_i32 : i32, i32
  }
  func.func @transform_4(%arg0: i32, %arg1: i32) -> (i32, i32) {
    %c0_i32 = arith.constant 0 : i32
    %c0_i32_0 = arith.constant 0 : i32
    return %arg0, %c0_i32 : i32, i32
  }
}

</mosaic_0001>

<llo_original>
// kernel: tpu_custom_call.1
$region0: #{tpu_custom_call.1}
  #allocation0 [shape = 'u32[]', space=smem, size = 0x4, offset = 0x4, fixed_abs, tag = 'smem constant byte address 0x4 - core index']
  #allocation1 [shape = 'u32[144,128]{1,0:T(1,128)}', space=vmem, size = 0x12000, scoped, tag = 'internal scratch']
  #allocation2 [shape = 'f32[8,32]{1,0:T(8,128)}', space=vmem, size = 0x1000, scoped, tag = 'scratch operand']
  #allocation3 [shape = 'f32[8,1]{1,0:T(8,128)}', space=vmem, size = 0x1000, scoped, tag = 'scratch operand']
  #allocation4 [shape = 'f32[8,1]{1,0:T(8,128)}', space=vmem, size = 0x1000, scoped, tag = 'scratch operand']
  #allocation5 [shape = 'f32[8,1]{1,0:T(8,128)}', space=vmem, size = 0x1000, scoped, tag = 'scratch operand']
  #allocation6 [shape = 'f32[1]{0:T(128)S(6)}', space=smem, size = 0x200, scoped, tag = 'scoped memory for tpu_custom_call.1']
  %s0 = inlined_call_operand.<no memory space> [shape: f32[1], index: 0, kind: input, shape index: {}]
  %s1 = inlined_call_operand.vmem [shape: f32[16,32], index: 1, kind: input, shape index: {}]
  %s2 = inlined_call_operand.vmem [shape: f32[12,32], index: 2, kind: input, shape index: {}]
  %s3 = inlined_call_operand.vmem [shape: f32[48,32], index: 3, kind: input, shape index: {}]
  %s4 = inlined_call_operand.vmem [shape: f32[16,1], index: 4, kind: output, shape index: {}]
  %s5 = sld [smem:[#allocation0]]
  $region57: #{tpu_custom_call.1} parent=0
    _
  %s7 = ssub.s32 1, %s5
  %s8 = scalar_select 0, %s7, %s5
  %9 = sst [smem:[#allocation6]] %s0
  loop: start=0, step=1, limit=8
  $region2: #{tpu_custom_call.1} parent=0 // loop_pre_header
    _
  $region3: #{tpu_custom_call.1} parent=0 // loop_header
    %s11 = sphi 0, %s15
    %p12 = scmp.ge.s32.totalorder %s11, 8
    %s18 = sphi 0, %s30
    %s19 = sphi 0, %s26
    %s20 = sphi 0, %s18
    %s21 = sphi 0, %s19
    %s22 = sphi 0, %s20
    %s23 = sphi 0, %s21
    %s31 = sphi 0, %s31
    %s33 = sphi 0, %s31
    %s34 = sphi 0, %s33
    %s48 = sphi 0, %s34
    %s54 = sphi 0, %s56
    %s57 = sphi 0, %s54
    %s58 = sphi 0, %s57
    %s74 = sphi 0, %s58
    %s78 = sphi 0, %s78
    %s80 = sphi 0, %s78
    %s81 = sphi 0, %s80
    %s95 = sphi 0, %s81
    %s101 = sphi 0, %s103
    %s104 = sphi 0, %s101
    %s105 = sphi 0, %s104
    %s121 = sphi 0, %s105
    %s127 = sphi 0, %s129
    %s130 = sphi 0, %s127
    %s131 = sphi 0, %s130
    %s147 = sphi 0, %s131
  $region4: #{tpu_custom_call.1} parent=0 // loop_header_branch
    %14 = sbr.rel (%p12) target = $region8
  $region5: #{tpu_custom_call.1} parent=0 // loop_body
    %s16 = ssub.s32 %s11, 1
    %s17 = ssub.s32 %s11, 2
    %s24 = sadd.s32 1, %s19
    %p25 = scmp.ge.s32.totalorder %s24, 3
    %s26 = scalar_select %p25, 0, %s24
    %s27 = sadd.s32 1, %s18
    %s28 = scalar_select %p25, %s27, %s18
    %p29 = scmp.ge.s32.totalorder %s28, 2
    %s30 = scalar_select %p29, 0, %s28
    %s32 = sadd.s32 %s31, 1
    %p35 = scmp.eq.s32.totalorder %s11, 5
    %p36 = scmp.ne.s32.totalorder %s31, %s33
    %p37 = scmp.eq.s32.totalorder %s11, 0
    %p38 = por %p36, %p37
    %p39 = scmp.ne.s32.totalorder %s31, %s33
    %p40 = scmp.eq.s32.totalorder %s16, 5
    %p41 = por %p39, %p40
    %p42 = scmp.ne.s32.totalorder %s33, %s34
    %p43 = scmp.eq.s32.totalorder %s16, 0
    %p44 = por %p42, %p43
    %p45 = scmp.ne.s32.totalorder %s33, %s34
    %p46 = scmp.eq.s32.totalorder %s17, 5
    %p47 = por %p45, %p46
    %p49 = scmp.ne.s32.totalorder %s34, %s48
    %p50 = scmp.eq.s32.totalorder %s17, 0
    %p51 = por %p49, %p50
    %s52 = ssub.s32 %s18, %s30
    %p53 = scmp.eq.s32.totalorder %s52, 0
    %s55 = sadd.s32 %s54, 1
    %s56 = scalar_select %p53, %s54, %s55
    %p59 = pneg %p53
    %p60 = scmp.eq.s32.totalorder %s11, 5
    %p61 = por %p59, %p60
    %p62 = scmp.ne.s32.totalorder %s54, %s57
    %p63 = scmp.eq.s32.totalorder %s11, 0
    %p64 = por %p62, %p63
    %p65 = scmp.ne.s32.totalorder %s54, %s57
    %p66 = scmp.eq.s32.totalorder %s16, 5
    %p67 = por %p65, %p66
    %p68 = scmp.ne.s32.totalorder %s57, %s58
    %p69 = scmp.eq.s32.totalorder %s16, 0
    %p70 = por %p68, %p69
    %p71 = scmp.ne.s32.totalorder %s57, %s58
    %p72 = scmp.eq.s32.totalorder %s17, 5
    %p73 = por %p71, %p72
    %p75 = scmp.ne.s32.totalorder %s58, %s74
    %p76 = scmp.eq.s32.totalorder %s17, 0
    %p77 = por %p75, %p76
    %s79 = sadd.s32 %s78, 1
    %p82 = scmp.eq.s32.totalorder %s11, 5
    %p83 = scmp.ne.s32.totalorder %s78, %s80
    %p84 = scmp.eq.s32.totalorder %s11, 0
    %p85 = por %p83, %p84
    %p86 = scmp.ne.s32.totalorder %s78, %s80
    %p87 = scmp.eq.s32.totalorder %s16, 5
    %p88 = por %p86, %p87
    %p89 = scmp.ne.s32.totalorder %s80, %s81
    %p90 = scmp.eq.s32.totalorder %s16, 0
    %p91 = por %p89, %p90
    %p92 = scmp.ne.s32.totalorder %s80, %s81
    %p93 = scmp.eq.s32.totalorder %s17, 5
    %p94 = por %p92, %p93
    %p96 = scmp.ne.s32.totalorder %s81, %s95
    %p97 = scmp.eq.s32.totalorder %s17, 0
    %p98 = por %p96, %p97
    %s99 = ssub.s32 %s19, %s26
    %p100 = scmp.eq.s32.totalorder %s99, 0
    %s102 = sadd.s32 %s101, 1
    %s103 = scalar_select %p100, %s101, %s102
    %p106 = pneg %p100
    %p107 = scmp.eq.s32.totalorder %s11, 5
    %p108 = por %p106, %p107
    %p109 = scmp.ne.s32.totalorder %s101, %s104
    %p110 = scmp.eq.s32.totalorder %s11, 0
    %p111 = por %p109, %p110
    %p112 = scmp.ne.s32.totalorder %s101, %s104
    %p113 = scmp.eq.s32.totalorder %s16, 5
    %p114 = por %p112, %p113
    %p115 = scmp.ne.s32.totalorder %s104, %s105
    %p116 = scmp.eq.s32.totalorder %s16, 0
    %p117 = por %p115, %p116
    %p118 = scmp.ne.s32.totalorder %s104, %s105
    %p119 = scmp.eq.s32.totalorder %s17, 5
    %p120 = por %p118, %p119
    %p122 = scmp.ne.s32.totalorder %s105, %s121
    %p123 = scmp.eq.s32.totalorder %s17, 0
    %p124 = por %p122, %p123
    %s125 = ssub.s32 %s18, %s30
    %p126 = scmp.eq.s32.totalorder %s125, 0
    %s128 = sadd.s32 %s127, 1
    %s129 = scalar_select %p126, %s127, %s128
    %p132 = pneg %p126
    %p133 = scmp.eq.s32.totalorder %s11, 5
    %p134 = por %p132, %p133
    %p135 = scmp.ne.s32.totalorder %s127, %s130
    %p136 = scmp.eq.s32.totalorder %s11, 0
    %p137 = por %p135, %p136
    %p138 = scmp.ne.s32.totalorder %s127, %s130
    %p139 = scmp.eq.s32.totalorder %s16, 5
    %p140 = por %p138, %p139
    %p141 = scmp.ne.s32.totalorder %s130, %s131
    %p142 = scmp.eq.s32.totalorder %s16, 0
    %p143 = por %p141, %p142
    %p144 = scmp.ne.s32.totalorder %s130, %s131
    %p145 = scmp.eq.s32.totalorder %s17, 5
    %p146 = por %p144, %p145
    %p148 = scmp.ne.s32.totalorder %s131, %s147
    %p149 = scmp.eq.s32.totalorder %s17, 0
    %p150 = por %p148, %p149
    %p151 = scmp.le.s32.totalorder 1, %s11
    %p152 = scmp.lt.s32.totalorder %s11, 7
    %p153 = pnand %p151, %p152
    %p154 = pneg %p153
    // Predicated region
    $region9: #{tpu_custom_call.1} parent=5 // pred_check
      _
    $region10: #{tpu_custom_call.1} parent=5 // pred_check_branch
      %156 = sbr.rel (%p153) target = $region12
    $region11: #{tpu_custom_call.1} parent=5 // pred_region
      %s157 = ssub.s32 %s11, 1
      // Predicated region
      $region13: #{tpu_custom_call.1} parent=11 // pred_check
        %p158 = pneg %p44
      $region14: #{tpu_custom_call.1} parent=11 // pred_check_branch
        %160 = sbr.rel (%p158) target = $region16
      $region15: #{tpu_custom_call.1} parent=11 // pred_region
        _
      $region16: #{tpu_custom_call.1} parent=11 // pred_fallthru
        _
      // Predicated region
      $region17: #{tpu_custom_call.1} parent=11 // pred_check
        %p161 = pneg %p91
      $region18: #{tpu_custom_call.1} parent=11 // pred_check_branch
        %163 = sbr.rel (%p161) target = $region20
      $region19: #{tpu_custom_call.1} parent=11 // pred_region
        _
      $region20: #{tpu_custom_call.1} parent=11 // pred_fallthru
        _
    $region12: #{tpu_custom_call.1} parent=5 // pred_fallthru
      _
    %p164 = scmp.lt.s32.totalorder %s11, 6
    // Predicated region
    $region21: #{tpu_custom_call.1} parent=5 // pred_check
      %p165 = pneg %p164
    $region22: #{tpu_custom_call.1} parent=5 // pred_check_branch
      %167 = sbr.rel (%p165) target = $region24
    $region23: #{tpu_custom_call.1} parent=5 // pred_region
      // Predicated region
      $region25: #{tpu_custom_call.1} parent=23 // pred_check
        %p168 = pneg %p64
      $region26: #{tpu_custom_call.1} parent=23 // pred_check_branch
        %170 = sbr.rel (%p168) target = $region28
      $region27: #{tpu_custom_call.1} parent=23 // pred_region
        %p171 = scmp.lt.s32.totalorder %s18, 1
        %s172 = scalar_select %p171, %s18, 1
        %s173 = smul.addr %s172, 8
        %s174 = scalar_lea.vmem %s1, %s173
      $region28: #{tpu_custom_call.1} parent=23 // pred_fallthru
        _
      // Predicated region
      $region29: #{tpu_custom_call.1} parent=23 // pred_check
        %p175 = pneg %p111
      $region30: #{tpu_custom_call.1} parent=23 // pred_check_branch
        %177 = sbr.rel (%p175) target = $region32
      $region31: #{tpu_custom_call.1} parent=23 // pred_region
        %s178 = smul.u32 2, %s19
        %p179 = scmp.lt.s32.totalorder %s178, 5
        %s180 = scalar_select %p179, %s178, 5
        %s181 = smul.addr %s180, 8
        %s182 = scalar_lea.vmem %s3, %s181
        %s183 = smul.u32 2, %s19
      $region32: #{tpu_custom_call.1} parent=23 // pred_fallthru
        _
    $region24: #{tpu_custom_call.1} parent=5 // pred_fallthru
      _
    %p184 = scmp.le.s32.totalorder 1, %s11
    %p185 = scmp.lt.s32.totalorder %s11, 7
    %p186 = pnand %p184, %p185
    %p187 = pneg %p186
    // Predicated region
    $region33: #{tpu_custom_call.1} parent=5 // pred_check
      _
    $region34: #{tpu_custom_call.1} parent=5 // pred_check_branch
      %189 = sbr.rel (%p186) target = $region36
    $region35: #{tpu_custom_call.1} parent=5 // pred_region
      %s190 = ssub.s32 %s11, 1
      %p191 = pneg %p44
      %p192 = pneg %p41
      %p193 = scmp.lt.s32.totalorder %s20, 1
      %s194 = scalar_select %p193, %s20, 1
      %s195 = smul.addr %s194, 8
      %s196 = scalar_lea.vmem %s1, %s195
      %p197 = pneg %p70
      %p198 = pneg %p67
      %p199 = pneg %p91
      %p200 = pneg %p88
      %s201 = smul.u32 2, %s21
      %p202 = scmp.lt.s32.totalorder %s201, 5
      %s203 = scalar_select %p202, %s201, 5
      %s204 = smul.addr %s203, 8
      %s205 = scalar_lea.vmem %s3, %s204
      %p206 = pneg %p117
      %p207 = pneg %p114
      %p208 = pneg %p143
      %p209 = pneg %p140
      %p210 = scmp.lt.s32.totalorder %s20, 1
      %s211 = scalar_select %p210, %s20, 1
      %s212 = smul.addr %s211, 8
      %s213 = scalar_lea.vmem %s4, %s212
      %p214 = scmp.lt.s32.totalorder %s20, 1
      %s215 = scalar_select %p214, %s20, 1
      %s216 = smul.addr %s215, 8
      %s217 = scalar_lea.vmem %s1, %s216
      %s218 = smul.u32 2, %s21
      %p219 = scmp.lt.s32.totalorder %s218, 5
      %s220 = scalar_select %p219, %s218, 5
      %s221 = smul.addr %s220, 8
      %s222 = scalar_lea.vmem %s3, %s221
      %s223 = smul.u32 2, %s21
      %p224 = scmp.lt.s32.totalorder %s20, 1
      %s225 = scalar_select %p224, %s20, 1
      %s226 = smul.addr %s225, 8
      %s227 = scalar_lea.vmem %s4, %s226
      %p228 = scmp.eq.s32.totalorder %s21, 0
      // Predicated region
      $region37: #{tpu_custom_call.1} parent=35 // pred_check
        %p229 = pneg %p228
      $region38: #{tpu_custom_call.1} parent=35 // pred_check_branch
        %231 = sbr.rel (%p229) target = $region40
      $region39: #{tpu_custom_call.1} parent=35 // pred_region
        %v232 = vld [vmem:[%s217] sm:$0xff]
        %v233 = vmul.f32 %v232, %v232
        %vm234 = vcmask 261120
        %v235 = vsel %vm234, %v233, 0.0
        %236 = vadd.xlane.f32.xlu0 %v235
        %v237 = vpop.xlane.xlu0 %236
        %v238 = vmax.f32 %v237, 1e-24
        %v239 = vrsqrt.pop %v238
        %s240 = sld [smem:[#allocation6]]
        %v241 = vstv %s240
        %v242 = vmul.f32 %v239, %v241
        %v243 = vmul.f32 %v232, %v242
        %244 = vst.msk [vmem:[#allocation2] sm:$0xff] %vm234, %v243
        %v245 = vld [vmem:[#allocation2] sm:$0xff]
        %v246 = vld [vmem:[%s2] sm:$0xff]
        %v247 = vld [vmem:[%s2 + $0x8] sm:$0xf]
        %v249 = vsel %vm234, %v245, 0
        %v252 = vsel %vm234, %v246, 0
        %v255 = vsel %vm234, %v247, 0
        %257 = vmatprep.subr.mxu0 0.0
        %258 = vmatpush1.xpose.msra.mxu0 0.0
        %259 = vmatprep.subr.mxu0 0.0
        %260 = vmatpush1.xpose.msra.mxu0 0.0
        %261 = vmatprep.subr.mxu0 0.0
        %262 = vmatpush1.xpose.msra.mxu0 0.0
        %263 = vmatprep.subr.mxu0 0.0
        %264 = vmatpush1.xpose.msra.mxu0 0.0
        %265 = vmatprep.subr.mxu0 0.0
        %266 = vmatpush1.xpose.msra.mxu0 0.0
        %267 = vmatprep.subr.mxu0 0.0
        %268 = vmatpush1.xpose.msra.mxu0 0.0
        %269 = vmatprep.subr.mxu0 0.0
        %270 = vmatpush1.xpose.msra.mxu0 0.0
        %271 = vmatprep.subr.mxu0 0.0
        %272 = vmatpush1.xpose.msra.mxu0 0.0
        %273 = vmatprep.subr.mxu0 0.0
        %274 = vmatpush1.xpose.msra.mxu0 0.0
        %275 = vmatprep.subr.mxu0 0.0
        %276 = vmatpush1.xpose.msra.mxu0 0.0
        %277 = vmatprep.subr.mxu0 0.0
        %278 = vmatpush1.xpose.msra.mxu0 0.0
        %279 = vmatprep.subr.mxu0 0.0
        %280 = vmatpush1.xpose.msra.mxu0 0.0
        %281 = vmatprep.subr.mxu0 0.0
        %282 = vmatpush1.xpose.msra.mxu0 0.0
        %283 = vmatprep.subr.mxu0 0.0
        %284 = vmatpush1.xpose.msra.mxu0 0.0
        %285 = vmatprep.subr.mxu0 0.0
        %286 = vmatpush1.xpose.msra.mxu0 %v255
        %287 = vmatprep.subr.mxu0 0.0
        %288 = vmatpush1.xpose.msra.mxu0 %v252
        %289 = vmatprep.subr.mxu0 0.0
        %290 = vmatpush2.xpose.msra.mxu0 0.0
        %291 = vmatprep.subr.mxu0 0.0
        %292 = vmatpush2.xpose.msra.mxu0 0.0
        %293 = vmatprep.subr.mxu0 0.0
        %294 = vmatpush2.xpose.msra.mxu0 0.0
        %295 = vmatprep.subr.mxu0 0.0
        %296 = vmatpush2.xpose.msra.mxu0 0.0
        %297 = vmatprep.subr.mxu0 0.0
        %298 = vmatpush2.xpose.msra.mxu0 0.0
        %299 = vmatprep.subr.mxu0 0.0
        %300 = vmatpush2.xpose.msra.mxu0 0.0
        %301 = vmatprep.subr.mxu0 0.0
        %302 = vmatpush2.xpose.msra.mxu0 0.0
        %303 = vmatprep.subr.mxu0 0.0
        %304 = vmatpush2.xpose.msra.mxu0 0.0
        %305 = vmatprep.subr.mxu0 0.0
        %306 = vmatpush2.xpose.msra.mxu0 0.0
        %307 = vmatprep.subr.mxu0 0.0
        %308 = vmatpush2.xpose.msra.mxu0 0.0
        %309 = vmatprep.subr.mxu0 0.0
        %310 = vmatpush2.xpose.msra.mxu0 0.0
        %311 = vmatprep.subr.mxu0 0.0
        %312 = vmatpush2.xpose.msra.mxu0 0.0
        %313 = vmatprep.subr.mxu0 0.0
        %314 = vmatpush2.xpose.msra.mxu0 0.0
        %315 = vmatprep.subr.mxu0 0.0
        %316 = vmatpush2.xpose.msra.mxu0 0.0
        %317 = vmatprep.subr.mxu0 0.0
        %318 = vmatpush2.xpose.msra.mxu0 0.0
        %319 = vmatprep.subr.mxu0 0.0
        %320 = vmatpush2.xpose.msra.mxu0 0.0
        %321 = vmatprep.mubr.f32.mxu0 0.0
        %322 = vmatmul.mubr.f32.gmra.mxu0 %v249
        %v323 = vpop.f32.mrf.mxu0
        %v324 = vadd.f32 0.0, %v323
        %v325 = vpop.f32.mrf.mxu0
        %326 = vdwg.mxu0
        %vm327 = vcmask 97280
        %v328 = vsel %vm327, %v324, -inf
        %329 = vmax.xlane.f32.xlu0 %v328
        %v330 = vpop.xlane.xlu0 %329
        %vm331 = vcmask 7168
        %332 = vst.msk [vmem:[#allocation3] sm:$0xff] %vm331, %v330
        %v333 = vsub.f32 %v324, %v330
        %v334 = vmul.f32 %v333, 1.442695
        %v335 = vpow.pop %v334
        %v336 = vsel %vm327, %v335, 0.0
        %337 = vadd.xlane.f32.xlu0 %v336
        %v338 = vpop.xlane.xlu0 %337
        %339 = vst.msk [vmem:[#allocation4] sm:$0xff] %vm331, %v338
        %340 = vst.msk [vmem:[#allocation5] sm:$0xff] %vm331, %v324
      $region40: #{tpu_custom_call.1} parent=35 // pred_fallthru
        _
      %v341 = vld [vmem:[%s222] sm:$0xff]
      %v342 = vld [vmem:[%s222 + $0x8] sm:$0xff]
      %v343 = vmul.f32 %v341, %v341
      %v344 = vmul.f32 %v342, %v342
      %vm345 = vcmask 261120
      %v347 = vsel %vm345, 1.0, 0
      %v350 = vsel %vm345, %v343, 0
      %v353 = vsel %vm345, %v344, 0
      %355 = vmatprep.subr.mxu0 0.0
      %356 = vmatpush1.xpose.msra.mxu0 0.0
      %357 = vmatprep.subr.mxu0 0.0
      %358 = vmatpush1.xpose.msra.mxu0 0.0
      %359 = vmatprep.subr.mxu0 0.0
      %360 = vmatpush1.xpose.msra.mxu0 0.0
      %361 = vmatprep.subr.mxu0 0.0
      %362 = vmatpush1.xpose.msra.mxu0 0.0
      %363 = vmatprep.subr.mxu0 0.0
      %364 = vmatpush1.xpose.msra.mxu0 0.0
      %365 = vmatprep.subr.mxu0 0.0
      %366 = vmatpush1.xpose.msra.mxu0 0.0
      %367 = vmatprep.subr.mxu0 0.0
      %368 = vmatpush1.xpose.msra.mxu0 0.0
      %369 = vmatprep.subr.mxu0 0.0
      %370 = vmatpush1.xpose.msra.mxu0 0.0
      %371 = vmatprep.subr.mxu0 0.0
      %372 = vmatpush1.xpose.msra.mxu0 0.0
      %373 = vmatprep.subr.mxu0 0.0
      %374 = vmatpush1.xpose.msra.mxu0 0.0
      %375 = vmatprep.subr.mxu0 0.0
      %376 = vmatpush1.xpose.msra.mxu0 0.0
      %377 = vmatprep.subr.mxu0 0.0
      %378 = vmatpush1.xpose.msra.mxu0 0.0
      %379 = vmatprep.subr.mxu0 0.0
      %380 = vmatpush1.xpose.msra.mxu0 0.0
      %381 = vmatprep.subr.mxu0 0.0
      %382 = vmatpush1.xpose.msra.mxu0 0.0
      %383 = vmatprep.subr.mxu0 0.0
      %384 = vmatpush1.xpose.msra.mxu0 %v353
      %385 = vmatprep.subr.mxu0 0.0
      %386 = vmatpush1.xpose.msra.mxu0 %v350
      %387 = vmatprep.subr.mxu0 0.0
      %388 = vmatpush2.xpose.msra.mxu0 0.0
      %389 = vmatprep.subr.mxu0 0.0
      %390 = vmatpush2.xpose.msra.mxu0 0.0
      %391 = vmatprep.subr.mxu0 0.0
      %392 = vmatpush2.xpose.msra.mxu0 0.0
      %393 = vmatprep.subr.mxu0 0.0
      %394 = vmatpush2.xpose.msra.mxu0 0.0
      %395 = vmatprep.subr.mxu0 0.0
      %396 = vmatpush2.xpose.msra.mxu0 0.0
      %397 = vmatprep.subr.mxu0 0.0
      %398 = vmatpush2.xpose.msra.mxu0 0.0
      %399 = vmatprep.subr.mxu0 0.0
      %400 = vmatpush2.xpose.msra.mxu0 0.0
      %401 = vmatprep.subr.mxu0 0.0
      %402 = vmatpush2.xpose.msra.mxu0 0.0
      %403 = vmatprep.subr.mxu0 0.0
      %404 = vmatpush2.xpose.msra.mxu0 0.0
      %405 = vmatprep.subr.mxu0 0.0
      %406 = vmatpush2.xpose.msra.mxu0 0.0
      %407 = vmatprep.subr.mxu0 0.0
      %408 = vmatpush2.xpose.msra.mxu0 0.0
      %409 = vmatprep.subr.mxu0 0.0
      %410 = vmatpush2.xpose.msra.mxu0 0.0
      %411 = vmatprep.subr.mxu0 0.0
      %412 = vmatpush2.xpose.msra.mxu0 0.0
      %413 = vmatprep.subr.mxu0 0.0
      %414 = vmatpush2.xpose.msra.mxu0 0.0
      %415 = vmatprep.subr.mxu0 0.0
      %416 = vmatpush2.xpose.msra.mxu0 0.0
      %417 = vmatprep.subr.mxu0 0.0
      %418 = vmatpush2.xpose.msra.mxu0 0.0
      %419 = vmatprep.mubr.f32.mxu0 0.0
      %420 = vmatmul.mubr.f32.gmra.mxu0 %v347
      %v421 = vpop.f32.mrf.mxu0
      %v422 = vadd.f32 0.0, %v421
      %v423 = vpop.f32.mrf.mxu0
      %424 = vdwg.mxu0
      %v425 = vmax.f32 %v422, 1e-24
      %v426 = vrsqrt.pop %v425
      %v427 = vld [vmem:[#allocation2] sm:$0xff]
      %v429 = vsel %vm345, %v427, 0
      %v432 = vsel %vm345, %v341, 0
      %v435 = vsel %vm345, %v342, 0
      %437 = vmatprep.subr.mxu0 0.0
      %438 = vmatpush1.xpose.msra.mxu0 0.0
      %439 = vmatprep.subr.mxu0 0.0
      %440 = vmatpush1.xpose.msra.mxu0 0.0
      %441 = vmatprep.subr.mxu0 0.0
      %442 = vmatpush1.xpose.msra.mxu0 0.0
      %443 = vmatprep.subr.mxu0 0.0
      %444 = vmatpush1.xpose.msra.mxu0 0.0
      %445 = vmatprep.subr.mxu0 0.0
      %446 = vmatpush1.xpose.msra.mxu0 0.0
      %447 = vmatprep.subr.mxu0 0.0
      %448 = vmatpush1.xpose.msra.mxu0 0.0
      %449 = vmatprep.subr.mxu0 0.0
      %450 = vmatpush1.xpose.msra.mxu0 0.0
      %451 = vmatprep.subr.mxu0 0.0
      %452 = vmatpush1.xpose.msra.mxu0 0.0
      %453 = vmatprep.subr.mxu0 0.0
      %454 = vmatpush1.xpose.msra.mxu0 0.0
      %455 = vmatprep.subr.mxu0 0.0
      %456 = vmatpush1.xpose.msra.mxu0 0.0
      %457 = vmatprep.subr.mxu0 0.0
      %458 = vmatpush1.xpose.msra.mxu0 0.0
      %459 = vmatprep.subr.mxu0 0.0
      %460 = vmatpush1.xpose.msra.mxu0 0.0
      %461 = vmatprep.subr.mxu0 0.0
      %462 = vmatpush1.xpose.msra.mxu0 0.0
      %463 = vmatprep.subr.mxu0 0.0
      %464 = vmatpush1.xpose.msra.mxu0 0.0
      %465 = vmatprep.subr.mxu0 0.0
      %466 = vmatpush1.xpose.msra.mxu0 %v435
      %467 = vmatprep.subr.mxu0 0.0
      %468 = vmatpush1.xpose.msra.mxu0 %v432
      %469 = vmatprep.subr.mxu0 0.0
      %470 = vmatpush2.xpose.msra.mxu0 0.0
      %471 = vmatprep.subr.mxu0 0.0
      %472 = vmatpush2.xpose.msra.mxu0 0.0
      %473 = vmatprep.subr.mxu0 0.0
      %474 = vmatpush2.xpose.msra.mxu0 0.0
      %475 = vmatprep.subr.mxu0 0.0
      %476 = vmatpush2.xpose.msra.mxu0 0.0
      %477 = vmatprep.subr.mxu0 0.0
      %478 = vmatpush2.xpose.msra.mxu0 0.0
      %479 = vmatprep.subr.mxu0 0.0
      %480 = vmatpush2.xpose.msra.mxu0 0.0
      %481 = vmatprep.subr.mxu0 0.0
      %482 = vmatpush2.xpose.msra.mxu0 0.0
      %483 = vmatprep.subr.mxu0 0.0
      %484 = vmatpush2.xpose.msra.mxu0 0.0
      %485 = vmatprep.subr.mxu0 0.0
      %486 = vmatpush2.xpose.msra.mxu0 0.0
      %487 = vmatprep.subr.mxu0 0.0
      %488 = vmatpush2.xpose.msra.mxu0 0.0
      %489 = vmatprep.subr.mxu0 0.0
      %490 = vmatpush2.xpose.msra.mxu0 0.0
      %491 = vmatprep.subr.mxu0 0.0
      %492 = vmatpush2.xpose.msra.mxu0 0.0
      %493 = vmatprep.subr.mxu0 0.0
      %494 = vmatpush2.xpose.msra.mxu0 0.0
      %495 = vmatprep.subr.mxu0 0.0
      %496 = vmatpush2.xpose.msra.mxu0 0.0
      %497 = vmatprep.subr.mxu0 0.0
      %498 = vmatpush2.xpose.msra.mxu0 0.0
      %499 = vmatprep.subr.mxu0 0.0
      %500 = vmatpush2.xpose.msra.mxu0 0.0
      %501 = vmatprep.mubr.f32.mxu0 0.0
      %502 = vmatmul.mubr.f32.gmra.mxu0 %v429
      %v503 = vpop.f32.mrf.mxu0
      %v504 = vadd.f32 0.0, %v503
      %v505 = vpop.f32.mrf.mxu0
      %506 = vdwg.mxu0
      %v507 = vlaneseq
      %v508 = vshrl.u32 %v507, 7
      %v509 = vsub.s32 0, %v508
      %v510 = vrot.slane %v426, %v509
      %v511 = vmul.f32 %v504, %v510
      %s512 = smul.u32 %s21, 16
      %v513 = vlaneseq
      %v514 = vand.u32 %v513, 127
      %v515 = vstv %s512
      %v516 = vadd.s32 %v515, %v514
      %vm517 = vcmp.lt.s32.totalorder %v516, 40
      %v518 = vsel %vm517, 0.0, -inf
      %v519 = vadd.f32 %v511, %v518
      %v520 = vld [vmem:[#allocation3] sm:$0xff]
      %vm521 = vcmask 130048
      %v522 = vsel %vm521, %v519, -inf
      %523 = vmax.xlane.f32.xlu0 %v522
      %v524 = vpop.xlane.xlu0 %523
      %v525 = vmax.f32 %v520, %v524
      %v526 = vsub.f32 %v520, %v525
      %v527 = vmul.f32 %v526, 1.442695
      %v528 = vpow.pop %v527
      %v529 = vld [vmem:[#allocation4] sm:$0xff]
      %v530 = vmul.f32 %v528, %v529
      %532 = vset.pattern.permute.xlu0 0
      %533 = vperm.xlu0 %532, %v525
      %v534 = vpop.permute.xlu0 %533
      %v536 = vsub.f32 %v519, %v534
      %v537 = vmul.f32 %v536, 1.442695
      %v538 = vpow.pop %v537
      %v539 = vsel %vm521, %v538, 0.0
      %540 = vadd.xlane.f32.xlu0 %v539
      %v541 = vpop.xlane.xlu0 %540
      %v542 = vadd.f32 %v530, %v541
      %vm543 = vcmask 7168
      %544 = vst.msk [vmem:[#allocation4] sm:$0xff] %vm543, %v542
      %545 = vst.msk [vmem:[#allocation3] sm:$0xff] %vm543, %v525
      %p546 = scmp.eq.s32.totalorder %s21, 2
      // Predicated region
      $region41: #{tpu_custom_call.1} parent=35 // pred_check
        %p547 = pneg %p546
      $region42: #{tpu_custom_call.1} parent=35 // pred_check_branch
        %549 = sbr.rel (%p547) target = $region44
      $region43: #{tpu_custom_call.1} parent=35 // pred_region
        %v550 = vld [vmem:[#allocation3] sm:$0xff]
        %v551 = vld [vmem:[#allocation4] sm:$0xff]
        %v552 = vlog2.pop %v551
        %v553 = vmul.f32 %v552, 0.6931472
        %v554 = vadd.f32 %v550, %v553
        %v555 = vld [vmem:[#allocation5] sm:$0xff]
        %v556 = vsub.f32 %v554, %v555
        %557 = vst.msk [vmem:[%s227] sm:$0xff] %vm543, %v556
      $region44: #{tpu_custom_call.1} parent=35 // pred_fallthru
        _
      %p558 = scmp.lt.s32.totalorder %s20, 1
      %s559 = scalar_select %p558, %s20, 1
      %s560 = smul.addr %s559, 8
      %s561 = scalar_lea.vmem %s4, %s560
      // Predicated region
      $region45: #{tpu_custom_call.1} parent=35 // pred_check
        %p562 = pneg %p140
      $region46: #{tpu_custom_call.1} parent=35 // pred_check_branch
        %564 = sbr.rel (%p562) target = $region48
      $region47: #{tpu_custom_call.1} parent=35 // pred_region
        _
      $region48: #{tpu_custom_call.1} parent=35 // pred_fallthru
        _
    $region36: #{tpu_custom_call.1} parent=5 // pred_fallthru
      _
    %p565 = scmp.le.s32.totalorder 2, %s11
    // Predicated region
    $region49: #{tpu_custom_call.1} parent=5 // pred_check
      %p566 = pneg %p565
    $region50: #{tpu_custom_call.1} parent=5 // pred_check_branch
      %568 = sbr.rel (%p566) target = $region52
    $region51: #{tpu_custom_call.1} parent=5 // pred_region
      %s569 = ssub.s32 %s11, 2
      // Predicated region
      $region53: #{tpu_custom_call.1} parent=51 // pred_check
        %p570 = pneg %p146
      $region54: #{tpu_custom_call.1} parent=51 // pred_check_branch
        %572 = sbr.rel (%p570) target = $region56
      $region55: #{tpu_custom_call.1} parent=51 // pred_region
        %p573 = scmp.lt.s32.totalorder %s22, 1
        %s574 = scalar_select %p573, %s22, 1
        %s575 = smul.addr %s574, 8
        %s576 = scalar_lea.vmem %s4, %s575
      $region56: #{tpu_custom_call.1} parent=51 // pred_fallthru
        _
    $region52: #{tpu_custom_call.1} parent=5 // pred_fallthru
      _
  $region6: #{tpu_custom_call.1} parent=0 // loop_footer
    %s15 = sadd.s32 1, %s11
  $region7: #{tpu_custom_call.1} parent=0 // loop_footer_branch
    %10 = sbr.rel target = $region3
  $region8: #{tpu_custom_call.1} parent=0 // loop_exit
    _

</llo_original>
